<compile_context>
chip_gen: v7x
topology: tpu7x:2x2x1
jax: 0.10.0
libtpu: 0.0.40
codegen_flags: <defaults>
</compile_context>

<pallas_src>
import functools

import jax
import jax.numpy as jnp
from jax.experimental import pallas as pl
from jax.experimental.pallas import tpu as pltpu


def _net3x_kernel(x_ref, w1_ref, b1_ref, w2_ref, b2_ref, w3_ref, b3_ref, o_ref):
    """Fused 3-layer pointwise net on one (n_in, tl) tile of one batch element."""
    x = x_ref[...]                                                  # (n_in, tl)

    # Layer 1: (n_hidden, n_in) @ (n_in, tl) -> (n_hidden, tl), f32 accumulate.
    h1 = jnp.dot(w1_ref[...], x, preferred_element_type=jnp.float32)
    h1 = jnp.maximum(h1 + b1_ref[...], 0.0)                         # bias (n_hidden, 1)

    # Layer 2: (n_hidden, n_hidden) @ (n_hidden, tl).
    h2 = jnp.dot(w2_ref[...], h1.astype(w2_ref.dtype),
                 preferred_element_type=jnp.float32)
    h2 = jnp.maximum(h2 + b2_ref[...], 0.0)

    # Layer 3: (n_out, n_hidden) @ (n_hidden, tl); Identity output activation.
    y = jnp.dot(w3_ref[...], h2.astype(w3_ref.dtype),
                preferred_element_type=jnp.float32)
    y = y + b3_ref[...]
    o_ref[...] = y.astype(o_ref.dtype)


def _pick_length_tile(L, n_in, n_hidden, n_out, itemsize, budget_bytes=12 << 20):
    """Largest L-tile (<=2048, multiple of 128 when tiling) within a VMEM budget."""
    if L <= 2048:
        return L                      # single tile covers the whole length

    def est(t):
        io_bufs = 2 * (n_in + n_out) * t * itemsize      # double-buffered in/out tiles
        mids = 2 * n_hidden * t * 4                      # f32 intermediates (scratch)
        return io_bufs + mids

    tl = 2048
    while tl > 128 and est(tl) > budget_bytes:
        tl //= 2
    return tl


def net_3xconv1d_forward(x, params, *, tl=None, compute_dtype=None):
    """x: (B, n_in, L) (NCL, like torch Conv1d) or (B, L). Returns (B, n_out, L)."""
    w1, b1, w2, b2, w3, b3 = params
    if x.ndim == 2:
        # torch: x.unsqueeze(-2) -> insert a size-1 channel dim.
        x = x[:, None, :]
    B, n_in, L = x.shape
    n_hidden = w1.shape[0]
    n_out = w3.shape[0]
    out_dtype = x.dtype

    # Optional reduced-precision matmul inputs (accumulation stays f32).
    if compute_dtype is not None:
        x = x.astype(compute_dtype)
        w1, w2, w3 = (w.astype(compute_dtype) for w in (w1, w2, w3))

    if tl is None:
        tl = _pick_length_tile(L, n_in, n_hidden, n_out, x.dtype.itemsize)
    Lp = ((L + tl - 1) // tl) * tl
    if Lp != L:
        x = jnp.pad(x, ((0, 0), (0, 0), (0, Lp - L)))

    # Biases as (C, 1) f32 so they broadcast across the position (lane) axis and
    # are added directly to the f32 accumulators.
    b1r = b1.reshape(n_hidden, 1).astype(jnp.float32)
    b2r = b2.reshape(n_hidden, 1).astype(jnp.float32)
    b3r = b3.reshape(n_out, 1).astype(jnp.float32)

    grid = (B, Lp // tl)
    wmap = lambda b, lt: (0, 0)       # weights/biases: one resident block

    flops = 2 * B * Lp * (n_in * n_hidden + n_hidden * n_hidden + n_hidden * n_out)
    bytes_accessed = (x.size * x.dtype.itemsize
                      + B * n_out * Lp * jnp.dtype(out_dtype).itemsize
                      + (w1.size + w2.size + w3.size) * w1.dtype.itemsize
                      + (b1r.size + b2r.size + b3r.size) * 4)

    out = pl.pallas_call(
        _net3x_kernel,
        out_shape=jax.ShapeDtypeStruct((B, n_out, Lp), out_dtype),
        grid_spec=pltpu.PrefetchScalarGridSpec(
            num_scalar_prefetch=0,
            grid=grid,
            in_specs=[
                # Batch dim squeezed (None) -> kernel sees (n_in, tl) etc.
                pl.BlockSpec((None, n_in, tl), lambda b, lt: (b, 0, lt)),   # x tile
                pl.BlockSpec((n_hidden, n_in), wmap),                        # W1
                pl.BlockSpec((n_hidden, 1), wmap),                           # b1
                pl.BlockSpec((n_hidden, n_hidden), wmap),                    # W2
                pl.BlockSpec((n_hidden, 1), wmap),                           # b2
                pl.BlockSpec((n_out, n_hidden), wmap),                       # W3
                pl.BlockSpec((n_out, 1), wmap),                              # b3
            ],
            out_specs=pl.BlockSpec((None, n_out, tl), lambda b, lt: (b, 0, lt)),
        ),
        compiler_params=pltpu.CompilerParams(
            dimension_semantics=("parallel", "parallel")),
        cost_estimate=pl.CostEstimate(flops=flops, transcendentals=0,
                                      bytes_accessed=bytes_accessed),
    )(x, w1, b1r, w2, b2r, w3, b3r)

    if Lp != L:
        out = out[:, :, :L]
    return out


def init_params(key, n_in, n_out, n_hidden, dtype=jnp.float32):
    """Deterministic init mimicking torch Conv1d default (uniform +/- 1/sqrt(fan_in))."""
    ks = jax.random.split(key, 6)

    def uni(k, shape, fan_in):
        bound = 1.0 / jnp.sqrt(float(fan_in))
        return jax.random.uniform(k, shape, dtype, -bound, bound)

    w1 = uni(ks[0], (n_hidden, n_in), n_in)
    b1 = uni(ks[1], (n_hidden,), n_in)
    w2 = uni(ks[2], (n_hidden, n_hidden), n_hidden)
    b2 = uni(ks[3], (n_hidden,), n_hidden)
    w3 = uni(ks[4], (n_out, n_hidden), n_hidden)
    b3 = uni(ks[5], (n_out,), n_hidden)
    return (w1, b1, w2, b2, w3, b3)


def reference_forward(x, params):
    """Pure-JAX reference of the PyTorch forward (for correctness check)."""
    w1, b1, w2, b2, w3, b3 = params
    if x.ndim == 2:
        x = x[:, None, :]
    h = jnp.einsum("oc,bcl->bol", w1, x) + b1[None, :, None]
    h = jnp.maximum(h, 0.0)
    h = jnp.einsum("oc,bcl->bol", w2, h) + b2[None, :, None]
    h = jnp.maximum(h, 0.0)
    y = jnp.einsum("oc,bcl->bol", w3, h) + b3[None, :, None]
    return y  # Identity output activation


if __name__ == "__main__":
    key = jax.random.PRNGKey(0)
    kx, kx2, kp = jax.random.split(key, 3)

    # Small shapes consistent with the module: batch=2, n_in=4, length=16,
    # n_hidden=32, n_out=8.
    B, n_in, L, n_hidden, n_out = 2, 4, 16, 32, 8
    x = jax.random.normal(kx, (B, n_in, L), dtype=jnp.float32)
    params = init_params(kp, n_in, n_out, n_hidden)

    fwd = jax.jit(functools.partial(net_3xconv1d_forward))
    y = jax.block_until_ready(fwd(x, params))
    y_ref = reference_forward(x, params)
    assert y.shape == (B, n_out, L), y.shape
    assert jnp.allclose(y, y_ref, atol=1e-5, rtol=1e-5), "mismatch vs reference (3D path)"

    # Also exercise the 2-D input path (torch's x.unsqueeze(-2) branch): n_in must be 1.
    params1 = init_params(kp, 1, n_out, n_hidden)
    x2 = jax.random.normal(kx2, (B, L), dtype=jnp.float32)
    y2 = jax.block_until_ready(jax.jit(net_3xconv1d_forward)(x2, params1))
    y2_ref = reference_forward(x2, params1)
    assert y2.shape == (B, n_out, L), y2.shape
    assert jnp.allclose(y2, y2_ref, atol=1e-5, rtol=1e-5), "mismatch vs reference (2D path)"

    print("KERNEL_OK")
</pallas_src>

<mosaic_0001>
module attributes {stable_mosaic.version = 11 : i64} {
  func.func @_net3x_kernel(%arg0: i32, %arg1: i32, %arg2: memref<1x4x16xf32, #tpu.memory_space<vmem>>, %arg3: memref<32x4xf32, #tpu.memory_space<vmem>>, %arg4: memref<32x1xf32, #tpu.memory_space<vmem>>, %arg5: memref<32x32xf32, #tpu.memory_space<vmem>>, %arg6: memref<32x1xf32, #tpu.memory_space<vmem>>, %arg7: memref<8x32xf32, #tpu.memory_space<vmem>>, %arg8: memref<8x1xf32, #tpu.memory_space<vmem>>, %arg9: memref<1x8x16xf32, #tpu.memory_space<vmem>>) attributes {dimension_semantics = [#tpu.dimension_semantics<parallel>, #tpu.dimension_semantics<parallel>], iteration_bounds = array<i64: 2, 1>, scalar_prefetch = 0 : i64, scratch_operands = 0 : i64, tpu.core_type = #tpu.core_type<tc>, window_params = [{transform_indices = @transform_0, window_bounds = array<i64: 1, 4, 16>}, {pipeline_mode = #tpu.pipeline_mode<synchronous>, transform_indices = @transform_1, window_bounds = array<i64: 32, 4>}, {pipeline_mode = #tpu.pipeline_mode<synchronous>, transform_indices = @transform_2, window_bounds = array<i64: 32, 1>}, {pipeline_mode = #tpu.pipeline_mode<synchronous>, transform_indices = @transform_3, window_bounds = array<i64: 32, 32>}, {pipeline_mode = #tpu.pipeline_mode<synchronous>, transform_indices = @transform_4, window_bounds = array<i64: 32, 1>}, {pipeline_mode = #tpu.pipeline_mode<synchronous>, transform_indices = @transform_5, window_bounds = array<i64: 8, 32>}, {pipeline_mode = #tpu.pipeline_mode<synchronous>, transform_indices = @transform_6, window_bounds = array<i64: 8, 1>}, {transform_indices = @transform_7, window_bounds = array<i64: 1, 8, 16>}]} {
    %c0 = arith.constant 0 : index
    %c0_0 = arith.constant 0 : index
    %c0_1 = arith.constant 0 : index
    %0 = vector.load %arg2[%c0, %c0_0, %c0_1] : memref<1x4x16xf32, #tpu.memory_space<vmem>>, vector<1x4x16xf32>
    %1 = vector.shape_cast %0 : vector<1x4x16xf32> to vector<4x16xf32>
    %c0_2 = arith.constant 0 : index
    %c0_3 = arith.constant 0 : index
    %2 = vector.load %arg3[%c0_2, %c0_3] : memref<32x4xf32, #tpu.memory_space<vmem>>, vector<32x4xf32>
    %cst = arith.constant dense<0.000000e+00> : vector<32x16xf32>
    %3 = tpu.matmul %2, %1, %cst {dimension_numbers = #tpu.dot_dimension_numbers<[1], [0], [0], [1], [0, 0, 1, 1], [], []>} : vector<32x4xf32>, vector<4x16xf32>, vector<32x16xf32> -> vector<32x16xf32>
    %c0_4 = arith.constant 0 : index
    %c0_5 = arith.constant 0 : index
    %4 = vector.load %arg4[%c0_4, %c0_5] : memref<32x1xf32, #tpu.memory_space<vmem>>, vector<32x1xf32>
    %5 = vector.broadcast %4 : vector<32x1xf32> to vector<32x16xf32>
    %6 = arith.addf %3, %5 : vector<32x16xf32>
    %cst_6 = arith.constant 0.000000e+00 : f32
    %7 = vector.broadcast %cst_6 : f32 to vector<32x16xf32>
    %8 = arith.maximumf %6, %7 : vector<32x16xf32>
    %c0_7 = arith.constant 0 : index
    %c0_8 = arith.constant 0 : index
    %9 = vector.load %arg5[%c0_7, %c0_8] : memref<32x32xf32, #tpu.memory_space<vmem>>, vector<32x32xf32>
    %cst_9 = arith.constant dense<0.000000e+00> : vector<32x16xf32>
    %10 = tpu.matmul %9, %8, %cst_9 {dimension_numbers = #tpu.dot_dimension_numbers<[1], [0], [0], [1], [0, 0, 1, 1], [], []>} : vector<32x32xf32>, vector<32x16xf32>, vector<32x16xf32> -> vector<32x16xf32>
    %c0_10 = arith.constant 0 : index
    %c0_11 = arith.constant 0 : index
    %11 = vector.load %arg6[%c0_10, %c0_11] : memref<32x1xf32, #tpu.memory_space<vmem>>, vector<32x1xf32>
    %12 = vector.broadcast %11 : vector<32x1xf32> to vector<32x16xf32>
    %13 = arith.addf %10, %12 : vector<32x16xf32>
    %cst_12 = arith.constant 0.000000e+00 : f32
    %14 = vector.broadcast %cst_12 : f32 to vector<32x16xf32>
    %15 = arith.maximumf %13, %14 : vector<32x16xf32>
    %c0_13 = arith.constant 0 : index
    %c0_14 = arith.constant 0 : index
    %16 = vector.load %arg7[%c0_13, %c0_14] : memref<8x32xf32, #tpu.memory_space<vmem>>, vector<8x32xf32>
    %cst_15 = arith.constant dense<0.000000e+00> : vector<8x16xf32>
    %17 = tpu.matmul %16, %15, %cst_15 {dimension_numbers = #tpu.dot_dimension_numbers<[1], [0], [0], [1], [0, 0, 1, 1], [], []>} : vector<8x32xf32>, vector<32x16xf32>, vector<8x16xf32> -> vector<8x16xf32>
    %c0_16 = arith.constant 0 : index
    %c0_17 = arith.constant 0 : index
    %18 = vector.load %arg8[%c0_16, %c0_17] : memref<8x1xf32, #tpu.memory_space<vmem>>, vector<8x1xf32>
    %19 = vector.broadcast %18 : vector<8x1xf32> to vector<8x16xf32>
    %20 = arith.addf %17, %19 : vector<8x16xf32>
    %c0_18 = arith.constant 0 : index
    %c0_19 = arith.constant 0 : index
    %c0_20 = arith.constant 0 : index
    %21 = vector.load %arg9[%c0_18, %c0_19, %c0_20] : memref<1x8x16xf32, #tpu.memory_space<vmem>>, vector<1x8x16xf32>
    %22 = vector.shape_cast %21 : vector<1x8x16xf32> to vector<8x16xf32>
    %23 = vector.shape_cast %20 : vector<8x16xf32> to vector<1x8x16xf32>
    tpu.vector_store %arg9[%c0_18, %c0_19, %c0_20], %23 {strides = array<i32>} : memref<1x8x16xf32, #tpu.memory_space<vmem>>, vector<1x8x16xf32>,
    return
  }
  func.func @transform_0(%arg0: i32, %arg1: i32) -> (i32, i32, i32) {
    %c0_i32 = arith.constant 0 : i32
    %c0_i32_0 = arith.constant 0 : i32
    return %arg0, %c0_i32, %arg1 : i32, i32, i32
  }
  func.func @transform_1(%arg0: i32, %arg1: i32) -> (i32, i32) {
    %c0_i32 = arith.constant 0 : i32
    %c0_i32_0 = arith.constant 0 : i32
    %c0_i32_1 = arith.constant 0 : i32
    return %c0_i32, %c0_i32_0 : i32, i32
  }
  func.func @transform_2(%arg0: i32, %arg1: i32) -> (i32, i32) {
    %c0_i32 = arith.constant 0 : i32
    %c0_i32_0 = arith.constant 0 : i32
    %c0_i32_1 = arith.constant 0 : i32
    return %c0_i32, %c0_i32_0 : i32, i32
  }
  func.func @transform_3(%arg0: i32, %arg1: i32) -> (i32, i32) {
    %c0_i32 = arith.constant 0 : i32
    %c0_i32_0 = arith.constant 0 : i32
    %c0_i32_1 = arith.constant 0 : i32
    return %c0_i32, %c0_i32_0 : i32, i32
  }
  func.func @transform_4(%arg0: i32, %arg1: i32) -> (i32, i32) {
    %c0_i32 = arith.constant 0 : i32
    %c0_i32_0 = arith.constant 0 : i32
    %c0_i32_1 = arith.constant 0 : i32
    return %c0_i32, %c0_i32_0 : i32, i32
  }
  func.func @transform_5(%arg0: i32, %arg1: i32) -> (i32, i32) {
    %c0_i32 = arith.constant 0 : i32
    %c0_i32_0 = arith.constant 0 : i32
    %c0_i32_1 = arith.constant 0 : i32
    return %c0_i32, %c0_i32_0 : i32, i32
  }
  func.func @transform_6(%arg0: i32, %arg1: i32) -> (i32, i32) {
    %c0_i32 = arith.constant 0 : i32
    %c0_i32_0 = arith.constant 0 : i32
    %c0_i32_1 = arith.constant 0 : i32
    return %c0_i32, %c0_i32_0 : i32, i32
  }
  func.func @transform_7(%arg0: i32, %arg1: i32) -> (i32, i32, i32) {
    %c0_i32 = arith.constant 0 : i32
    %c0_i32_0 = arith.constant 0 : i32
    return %arg0, %c0_i32, %arg1 : i32, i32, i32
  }
}

</mosaic_0001>

<llo_original>
// kernel: net_3xconv1d_forward.1
$region0: #{net_3xconv1d_forward.1}
  #allocation0 [shape = 'u32[]', space=smem, size = 0x4, offset = 0x4, fixed_abs, tag = 'smem constant byte address 0x4 - core index']
  #allocation1 [shape = 'u32[144,128]{1,0:T(1,128)}', space=vmem, size = 0x12000, scoped, tag = 'internal scratch']
  %s0 = inlined_call_operand.vmem [shape: f32[2,4,16], index: 0, kind: input, shape index: {}]
  %s1 = inlined_call_operand.vmem [shape: f32[32,4], index: 1, kind: input, shape index: {}]
  %s2 = inlined_call_operand.vmem [shape: f32[32,1], index: 2, kind: input, shape index: {}]
  %s3 = inlined_call_operand.vmem [shape: f32[32,32], index: 3, kind: input, shape index: {}]
  %s4 = inlined_call_operand.vmem [shape: f32[32,1], index: 4, kind: input, shape index: {}]
  %s5 = inlined_call_operand.vmem [shape: f32[8,32], index: 5, kind: input, shape index: {}]
  %s6 = inlined_call_operand.vmem [shape: f32[8,1], index: 6, kind: input, shape index: {}]
  %s7 = inlined_call_operand.hbm [shape: f32[2,8,16], index: 7, kind: output, shape index: {}]
  %s8 = sld [smem:[#allocation0]]
  $region61: #{net_3xconv1d_forward.1} parent=0
    _
  %s10 = ssub.s32 1, %s8
  %s11 = scalar_select 0, %s10, %s8
  $region1: #{net_3xconv1d_forward.1} parent=0
    #allocation2 [shape = 'u8[8192]{0}', space=vmem, size = 0x2000, scoped, tag = 'output window, operand 0']
    #allocation3 [shape = 's32[2]{0}', space=sflag, size = 0x8, scoped, tag = 'scoped memory for net_3xconv1d_forward.1']
    %12 = vsyncpa [#allocation3], 0
    %s13 = scalar_lea.sflag [#allocation3], 1
    %14 = vsyncpa %s13, 0
    loop: start=0, step=1, limit=4
    $region2: #{net_3xconv1d_forward.1} parent=1 // loop_pre_header
      _
    $region3: #{net_3xconv1d_forward.1} parent=1 // loop_header
      %s16 = sphi 0, %s20
      %p17 = scmp.ge.s32.totalorder %s16, 4
      %s23 = sphi 0, %s35
      %s24 = sphi 0, %s31
      %s25 = sphi 0, %s23
      %s26 = sphi 0, %s24
      %s27 = sphi 0, %s25
      %s28 = sphi 0, %s26
      %s40 = sphi 0, %s42
      %s43 = sphi 0, %s40
      %s44 = sphi 0, %s43
      %s60 = sphi 0, %s44
      %s64 = sphi 0, %s64
      %s66 = sphi 0, %s64
      %s67 = sphi 0, %s66
      %s81 = sphi 0, %s67
      %s85 = sphi 0, %s85
      %s87 = sphi 0, %s85
      %s88 = sphi 0, %s87
      %s102 = sphi 0, %s88
      %s106 = sphi 0, %s106
      %s108 = sphi 0, %s106
      %s109 = sphi 0, %s108
      %s123 = sphi 0, %s109
      %s127 = sphi 0, %s127
      %s129 = sphi 0, %s127
      %s130 = sphi 0, %s129
      %s144 = sphi 0, %s130
      %s148 = sphi 0, %s148
      %s150 = sphi 0, %s148
      %s151 = sphi 0, %s150
      %s165 = sphi 0, %s151
      %s169 = sphi 0, %s169
      %s171 = sphi 0, %s169
      %s172 = sphi 0, %s171
      %s186 = sphi 0, %s172
      %s194 = sphi 0, %s196
      %s197 = sphi 0, %s194
      %s198 = sphi 0, %s197
      %s214 = sphi 0, %s198
    $region4: #{net_3xconv1d_forward.1} parent=1 // loop_header_branch
      %19 = sbr.rel (%p17) target = $region8
    $region5: #{net_3xconv1d_forward.1} parent=1 // loop_body
      %s21 = ssub.s32 %s16, 1
      %s22 = ssub.s32 %s16, 2
      %s29 = sadd.s32 1, %s24
      %p30 = scmp.ge.s32.totalorder %s29, 1
      %s31 = scalar_select %p30, 0, %s29
      %s32 = sadd.s32 1, %s23
      %s33 = scalar_select %p30, %s32, %s23
      %p34 = scmp.ge.s32.totalorder %s33, 2
      %s35 = scalar_select %p34, 0, %s33
      %s36 = ssub.s32 %s23, %s35
      %s37 = ssub.s32 %s24, %s31
      %s38 = sor.u32 %s36, %s37
      %p39 = scmp.eq.s32.totalorder %s38, 0
      %s41 = sadd.s32 %s40, 1
      %s42 = scalar_select %p39, %s40, %s41
      %p45 = pneg %p39
      %p46 = scmp.eq.s32.totalorder %s16, 1
      %p47 = por %p45, %p46
      %p48 = scmp.ne.s32.totalorder %s40, %s43
      %p49 = scmp.eq.s32.totalorder %s16, 0
      %p50 = por %p48, %p49
      %p51 = scmp.ne.s32.totalorder %s40, %s43
      %p52 = scmp.eq.s32.totalorder %s21, 1
      %p53 = por %p51, %p52
      %p54 = scmp.ne.s32.totalorder %s43, %s44
      %p55 = scmp.eq.s32.totalorder %s21, 0
      %p56 = por %p54, %p55
      %p57 = scmp.ne.s32.totalorder %s43, %s44
      %p58 = scmp.eq.s32.totalorder %s22, 1
      %p59 = por %p57, %p58
      %p61 = scmp.ne.s32.totalorder %s44, %s60
      %p62 = scmp.eq.s32.totalorder %s22, 0
      %p63 = por %p61, %p62
      %s65 = sadd.s32 %s64, 1
      %p68 = scmp.eq.s32.totalorder %s16, 1
      %p69 = scmp.ne.s32.totalorder %s64, %s66
      %p70 = scmp.eq.s32.totalorder %s16, 0
      %p71 = por %p69, %p70
      %p72 = scmp.ne.s32.totalorder %s64, %s66
      %p73 = scmp.eq.s32.totalorder %s21, 1
      %p74 = por %p72, %p73
      %p75 = scmp.ne.s32.totalorder %s66, %s67
      %p76 = scmp.eq.s32.totalorder %s21, 0
      %p77 = por %p75, %p76
      %p78 = scmp.ne.s32.totalorder %s66, %s67
      %p79 = scmp.eq.s32.totalorder %s22, 1
      %p80 = por %p78, %p79
      %p82 = scmp.ne.s32.totalorder %s67, %s81
      %p83 = scmp.eq.s32.totalorder %s22, 0
      %p84 = por %p82, %p83
      %s86 = sadd.s32 %s85, 1
      %p89 = scmp.eq.s32.totalorder %s16, 1
      %p90 = scmp.ne.s32.totalorder %s85, %s87
      %p91 = scmp.eq.s32.totalorder %s16, 0
      %p92 = por %p90, %p91
      %p93 = scmp.ne.s32.totalorder %s85, %s87
      %p94 = scmp.eq.s32.totalorder %s21, 1
      %p95 = por %p93, %p94
      %p96 = scmp.ne.s32.totalorder %s87, %s88
      %p97 = scmp.eq.s32.totalorder %s21, 0
      %p98 = por %p96, %p97
      %p99 = scmp.ne.s32.totalorder %s87, %s88
      %p100 = scmp.eq.s32.totalorder %s22, 1
      %p101 = por %p99, %p100
      %p103 = scmp.ne.s32.totalorder %s88, %s102
      %p104 = scmp.eq.s32.totalorder %s22, 0
      %p105 = por %p103, %p104
      %s107 = sadd.s32 %s106, 1
      %p110 = scmp.eq.s32.totalorder %s16, 1
      %p111 = scmp.ne.s32.totalorder %s106, %s108
      %p112 = scmp.eq.s32.totalorder %s16, 0
      %p113 = por %p111, %p112
      %p114 = scmp.ne.s32.totalorder %s106, %s108
      %p115 = scmp.eq.s32.totalorder %s21, 1
      %p116 = por %p114, %p115
      %p117 = scmp.ne.s32.totalorder %s108, %s109
      %p118 = scmp.eq.s32.totalorder %s21, 0
      %p119 = por %p117, %p118
      %p120 = scmp.ne.s32.totalorder %s108, %s109
      %p121 = scmp.eq.s32.totalorder %s22, 1
      %p122 = por %p120, %p121
      %p124 = scmp.ne.s32.totalorder %s109, %s123
      %p125 = scmp.eq.s32.totalorder %s22, 0
      %p126 = por %p124, %p125
      %s128 = sadd.s32 %s127, 1
      %p131 = scmp.eq.s32.totalorder %s16, 1
      %p132 = scmp.ne.s32.totalorder %s127, %s129
      %p133 = scmp.eq.s32.totalorder %s16, 0
      %p134 = por %p132, %p133
      %p135 = scmp.ne.s32.totalorder %s127, %s129
      %p136 = scmp.eq.s32.totalorder %s21, 1
      %p137 = por %p135, %p136
      %p138 = scmp.ne.s32.totalorder %s129, %s130
      %p139 = scmp.eq.s32.totalorder %s21, 0
      %p140 = por %p138, %p139
      %p141 = scmp.ne.s32.totalorder %s129, %s130
      %p142 = scmp.eq.s32.totalorder %s22, 1
      %p143 = por %p141, %p142
      %p145 = scmp.ne.s32.totalorder %s130, %s144
      %p146 = scmp.eq.s32.totalorder %s22, 0
      %p147 = por %p145, %p146
      %s149 = sadd.s32 %s148, 1
      %p152 = scmp.eq.s32.totalorder %s16, 1
      %p153 = scmp.ne.s32.totalorder %s148, %s150
      %p154 = scmp.eq.s32.totalorder %s16, 0
      %p155 = por %p153, %p154
      %p156 = scmp.ne.s32.totalorder %s148, %s150
      %p157 = scmp.eq.s32.totalorder %s21, 1
      %p158 = por %p156, %p157
      %p159 = scmp.ne.s32.totalorder %s150, %s151
      %p160 = scmp.eq.s32.totalorder %s21, 0
      %p161 = por %p159, %p160
      %p162 = scmp.ne.s32.totalorder %s150, %s151
      %p163 = scmp.eq.s32.totalorder %s22, 1
      %p164 = por %p162, %p163
      %p166 = scmp.ne.s32.totalorder %s151, %s165
      %p167 = scmp.eq.s32.totalorder %s22, 0
      %p168 = por %p166, %p167
      %s170 = sadd.s32 %s169, 1
      %p173 = scmp.eq.s32.totalorder %s16, 1
      %p174 = scmp.ne.s32.totalorder %s169, %s171
      %p175 = scmp.eq.s32.totalorder %s16, 0
      %p176 = por %p174, %p175
      %p177 = scmp.ne.s32.totalorder %s169, %s171
      %p178 = scmp.eq.s32.totalorder %s21, 1
      %p179 = por %p177, %p178
      %p180 = scmp.ne.s32.totalorder %s171, %s172
      %p181 = scmp.eq.s32.totalorder %s21, 0
      %p182 = por %p180, %p181
      %p183 = scmp.ne.s32.totalorder %s171, %s172
      %p184 = scmp.eq.s32.totalorder %s22, 1
      %p185 = por %p183, %p184
      %p187 = scmp.ne.s32.totalorder %s172, %s186
      %p188 = scmp.eq.s32.totalorder %s22, 0
      %p189 = por %p187, %p188
      %s190 = ssub.s32 %s23, %s35
      %s191 = ssub.s32 %s24, %s31
      %s192 = sor.u32 %s190, %s191
      %p193 = scmp.eq.s32.totalorder %s192, 0
      %s195 = sadd.s32 %s194, 1
      %s196 = scalar_select %p193, %s194, %s195
      %p199 = pneg %p193
      %p200 = scmp.eq.s32.totalorder %s16, 1
      %p201 = por %p199, %p200
      %p202 = scmp.ne.s32.totalorder %s194, %s197
      %p203 = scmp.eq.s32.totalorder %s16, 0
      %p204 = por %p202, %p203
      %p205 = scmp.ne.s32.totalorder %s194, %s197
      %p206 = scmp.eq.s32.totalorder %s21, 1
      %p207 = por %p205, %p206
      %p208 = scmp.ne.s32.totalorder %s197, %s198
      %p209 = scmp.eq.s32.totalorder %s21, 0
      %p210 = por %p208, %p209
      %p211 = scmp.ne.s32.totalorder %s197, %s198
      %p212 = scmp.eq.s32.totalorder %s22, 1
      %p213 = por %p211, %p212
      %p215 = scmp.ne.s32.totalorder %s198, %s214
      %p216 = scmp.eq.s32.totalorder %s22, 0
      %p217 = por %p215, %p216
      %p218 = scmp.le.s32.totalorder 1, %s16
      %p219 = scmp.lt.s32.totalorder %s16, 3
      %p220 = pnand %p218, %p219
      %p221 = pneg %p220
      // Predicated region
      $region9: #{net_3xconv1d_forward.1} parent=5 // pred_check
        _
      $region10: #{net_3xconv1d_forward.1} parent=5 // pred_check_branch
        %223 = sbr.rel (%p220) target = $region12
      $region11: #{net_3xconv1d_forward.1} parent=5 // pred_region
        %s224 = ssub.s32 %s16, 1
        // Predicated region
        $region13: #{net_3xconv1d_forward.1} parent=11 // pred_check
          %p225 = pneg %p77
        $region14: #{net_3xconv1d_forward.1} parent=11 // pred_check_branch
          %227 = sbr.rel (%p225) target = $region16
        $region15: #{net_3xconv1d_forward.1} parent=11 // pred_region
          _
        $region16: #{net_3xconv1d_forward.1} parent=11 // pred_fallthru
          _
        // Predicated region
        $region17: #{net_3xconv1d_forward.1} parent=11 // pred_check
          %p228 = pneg %p98
        $region18: #{net_3xconv1d_forward.1} parent=11 // pred_check_branch
          %230 = sbr.rel (%p228) target = $region20
        $region19: #{net_3xconv1d_forward.1} parent=11 // pred_region
          _
        $region20: #{net_3xconv1d_forward.1} parent=11 // pred_fallthru
          _
        // Predicated region
        $region21: #{net_3xconv1d_forward.1} parent=11 // pred_check
          %p231 = pneg %p119
        $region22: #{net_3xconv1d_forward.1} parent=11 // pred_check_branch
          %233 = sbr.rel (%p231) target = $region24
        $region23: #{net_3xconv1d_forward.1} parent=11 // pred_region
          _
        $region24: #{net_3xconv1d_forward.1} parent=11 // pred_fallthru
          _
        // Predicated region
        $region25: #{net_3xconv1d_forward.1} parent=11 // pred_check
          %p234 = pneg %p140
        $region26: #{net_3xconv1d_forward.1} parent=11 // pred_check_branch
          %236 = sbr.rel (%p234) target = $region28
        $region27: #{net_3xconv1d_forward.1} parent=11 // pred_region
          _
        $region28: #{net_3xconv1d_forward.1} parent=11 // pred_fallthru
          _
        // Predicated region
        $region29: #{net_3xconv1d_forward.1} parent=11 // pred_check
          %p237 = pneg %p161
        $region30: #{net_3xconv1d_forward.1} parent=11 // pred_check_branch
          %239 = sbr.rel (%p237) target = $region32
        $region31: #{net_3xconv1d_forward.1} parent=11 // pred_region
          _
        $region32: #{net_3xconv1d_forward.1} parent=11 // pred_fallthru
          _
        // Predicated region
        $region33: #{net_3xconv1d_forward.1} parent=11 // pred_check
          %p240 = pneg %p182
        $region34: #{net_3xconv1d_forward.1} parent=11 // pred_check_branch
          %242 = sbr.rel (%p240) target = $region36
        $region35: #{net_3xconv1d_forward.1} parent=11 // pred_region
          _
        $region36: #{net_3xconv1d_forward.1} parent=11 // pred_fallthru
          _
      $region12: #{net_3xconv1d_forward.1} parent=5 // pred_fallthru
        _
      %p243 = scmp.lt.s32.totalorder %s16, 2
      // Predicated region
      $region37: #{net_3xconv1d_forward.1} parent=5 // pred_check
        %p244 = pneg %p243
      $region38: #{net_3xconv1d_forward.1} parent=5 // pred_check_branch
        %246 = sbr.rel (%p244) target = $region40
      $region39: #{net_3xconv1d_forward.1} parent=5 // pred_region
        // Predicated region
        $region41: #{net_3xconv1d_forward.1} parent=39 // pred_check
          %p247 = pneg %p50
        $region42: #{net_3xconv1d_forward.1} parent=39 // pred_check_branch
          %249 = sbr.rel (%p247) target = $region44
        $region43: #{net_3xconv1d_forward.1} parent=39 // pred_region
          %p250 = scmp.lt.s32.totalorder %s23, 1
          %s251 = scalar_select %p250, %s23, 1
          %p252 = scmp.lt.s32.totalorder %s24, 0
          %s253 = scalar_select %p252, %s24, 0
          %s254 = sadd.s32 %s253, %s251
          %s255 = smul.addr %s254, 4
          %s256 = scalar_lea.vmem %s0, %s255
        $region44: #{net_3xconv1d_forward.1} parent=39 // pred_fallthru
          _
      $region40: #{net_3xconv1d_forward.1} parent=5 // pred_fallthru
        _
      %p257 = scmp.le.s32.totalorder 1, %s16
      %p258 = scmp.lt.s32.totalorder %s16, 3
      %p259 = pnand %p257, %p258
      %p260 = pneg %p259
      // Predicated region
      $region45: #{net_3xconv1d_forward.1} parent=5 // pred_check
        _
      $region46: #{net_3xconv1d_forward.1} parent=5 // pred_check_branch
        %262 = sbr.rel (%p259) target = $region48
      $region47: #{net_3xconv1d_forward.1} parent=5 // pred_region
        %s263 = ssub.s32 %s16, 1
        %p264 = scmp.lt.s32.totalorder %s25, 1
        %s265 = scalar_select %p264, %s25, 1
        %p266 = scmp.lt.s32.totalorder %s26, 0
        %s267 = scalar_select %p266, %s26, 0
        %s268 = sadd.s32 %s267, %s265
        %s269 = smul.addr %s268, 4
        %s270 = scalar_lea.vmem %s0, %s269
        %p271 = pneg %p56
        %p272 = pneg %p53
        %p273 = pneg %p77
        %p274 = pneg %p74
        %p275 = pneg %p98
        %p276 = pneg %p95
        %p277 = pneg %p119
        %p278 = pneg %p116
        %p279 = pneg %p140
        %p280 = pneg %p137
        %p281 = pneg %p161
        %p282 = pneg %p158
        %p283 = pneg %p182
        %p284 = pneg %p179
        %p285 = pneg %p210
        %p286 = pneg %p207
        %s287 = sand.u32 %s197, 1
        %s288 = scalar_lea.sflag [#allocation3], %s287
        %s289 = sand.u32 %s197, 1
        %s290 = smul.addr %s289, 8
        %s291 = scalar_lea.vmem [#allocation2], %s290
        %p292 = scmp.lt.s32.totalorder %s25, 1
        %s293 = scalar_select %p292, %s25, 1
        %p294 = scmp.lt.s32.totalorder %s26, 0
        %s295 = scalar_select %p294, %s26, 0
        %s296 = sadd.s32 %s295, %s293
        %s297 = smul.addr %s296, 4
        %s298 = scalar_lea.vmem %s0, %s297
        %v299 = vld [vmem:[%s298] sm:$0xf]
        %v300 = vld [vmem:[%s1] sm:$0xff]
        %v301 = vld [vmem:[%s1 + $0x8] sm:$0xff]
        %v302 = vld [vmem:[%s1 + $0x10] sm:$0xff]
        %v303 = vld [vmem:[%s1 + $0x18] sm:$0xff]
        %v304 = vld [vmem:[%s2] sm:$0xff]
        %v305 = vld [vmem:[%s2 + $0x8] sm:$0xff]
        %v306 = vld [vmem:[%s2 + $0x10] sm:$0xff]
        %v307 = vld [vmem:[%s2 + $0x18] sm:$0xff]
        %309 = vset.pattern.permute.xlu0 0
        %310 = vperm.xlu0 %309, %v304
        %v311 = vpop.permute.xlu0 %310
        %314 = vset.pattern.permute.xlu0 0
        %315 = vperm.xlu0 %314, %v305
        %v316 = vpop.permute.xlu0 %315
        %319 = vset.pattern.permute.xlu0 0
        %320 = vperm.xlu0 %319, %v306
        %v321 = vpop.permute.xlu0 %320
        %324 = vset.pattern.permute.xlu0 0
        %325 = vperm.xlu0 %324, %v307
        %v326 = vpop.permute.xlu0 %325
        %vm328 = vcmask 31744
        %v330 = vsel %vm328, %v300, 0
        %v333 = vsel %vm328, %v301, 0
        %v336 = vsel %vm328, %v302, 0
        %v339 = vsel %vm328, %v303, 0
        %vm341 = vcmask 1043456
        %v343 = vsel %vm341, %v299, 0
        %345 = vmatprep.subr.mxu0 0.0
        %346 = vmatpush1.msra.mxu0 %v343
        %347 = vmatprep.subr.mxu0 0.0
        %348 = vmatpush1.msra.mxu0 0.0
        %349 = vmatprep.subr.mxu0 0.0
        %350 = vmatpush1.msra.mxu0 0.0
        %351 = vmatprep.subr.mxu0 0.0
        %352 = vmatpush1.msra.mxu0 0.0
        %353 = vmatprep.subr.mxu0 0.0
        %354 = vmatpush1.msra.mxu0 0.0
        %355 = vmatprep.subr.mxu0 0.0
        %356 = vmatpush1.msra.mxu0 0.0
        %357 = vmatprep.subr.mxu0 0.0
        %358 = vmatpush1.msra.mxu0 0.0
        %359 = vmatprep.subr.mxu0 0.0
        %360 = vmatpush1.msra.mxu0 0.0
        %361 = vmatprep.subr.mxu0 0.0
        %362 = vmatpush1.msra.mxu0 0.0
        %363 = vmatprep.subr.mxu0 0.0
        %364 = vmatpush1.msra.mxu0 0.0
        %365 = vmatprep.subr.mxu0 0.0
        %366 = vmatpush1.msra.mxu0 0.0
        %367 = vmatprep.subr.mxu0 0.0
        %368 = vmatpush1.msra.mxu0 0.0
        %369 = vmatprep.subr.mxu0 0.0
        %370 = vmatpush1.msra.mxu0 0.0
        %371 = vmatprep.subr.mxu0 0.0
        %372 = vmatpush1.msra.mxu0 0.0
        %373 = vmatprep.subr.mxu0 0.0
        %374 = vmatpush1.msra.mxu0 0.0
        %375 = vmatprep.subr.mxu0 0.0
        %376 = vmatpush1.msra.mxu0 0.0
        %377 = vmatprep.subr.mxu0 0.0
        %378 = vmatpush1.msra.mxu0 0.0
        %379 = vmatprep.subr.mxu0 0.0
        %380 = vmatpush1.msra.mxu0 0.0
        %381 = vmatprep.subr.mxu0 0.0
        %382 = vmatpush1.msra.mxu0 0.0
        %383 = vmatprep.subr.mxu0 0.0
        %384 = vmatpush1.msra.mxu0 0.0
        %385 = vmatprep.subr.mxu0 0.0
        %386 = vmatpush1.msra.mxu0 0.0
        %387 = vmatprep.subr.mxu0 0.0
        %388 = vmatpush1.msra.mxu0 0.0
        %389 = vmatprep.subr.mxu0 0.0
        %390 = vmatpush1.msra.mxu0 0.0
        %391 = vmatprep.subr.mxu0 0.0
        %392 = vmatpush1.msra.mxu0 0.0
        %393 = vmatprep.subr.mxu0 0.0
        %394 = vmatpush1.msra.mxu0 0.0
        %395 = vmatprep.subr.mxu0 0.0
        %396 = vmatpush1.msra.mxu0 0.0
        %397 = vmatprep.subr.mxu0 0.0
        %398 = vmatpush1.msra.mxu0 0.0
        %399 = vmatprep.subr.mxu0 0.0
        %400 = vmatpush1.msra.mxu0 0.0
        %401 = vmatprep.subr.mxu0 0.0
        %402 = vmatpush1.msra.mxu0 0.0
        %403 = vmatprep.subr.mxu0 0.0
        %404 = vmatpush1.msra.mxu0 0.0
        %405 = vmatprep.subr.mxu0 0.0
        %406 = vmatpush1.msra.mxu0 0.0
        %407 = vmatprep.subr.mxu0 0.0
        %408 = vmatpush1.msra.mxu0 0.0
        %409 = vmatprep.mubr.f32.mxu0 0.0
        %410 = vmatmul.mubr.f32.gmra.mrb[0].mxu0 %v330
        %v411 = vpop.f32.mrb[0].mxu0
        %v412 = vadd.f32 %v311, %v411
        %v413 = vpop.f32.mrb[0].mxu0
        %414 = vmatprep.mubr.f32.mxu0 0.0
        %415 = vmatmul.mubr.f32.gmra.mrb[0].mxu0 %v333
        %v416 = vpop.f32.mrb[0].mxu0
        %v417 = vadd.f32 %v316, %v416
        %v418 = vpop.f32.mrb[0].mxu0
        %419 = vmatprep.mubr.f32.mxu0 0.0
        %420 = vmatmul.mubr.f32.gmra.mrb[0].mxu0 %v336
        %v421 = vpop.f32.mrb[0].mxu0
        %v422 = vadd.f32 %v321, %v421
        %v423 = vpop.f32.mrb[0].mxu0
        %424 = vmatprep.mubr.f32.mxu0 0.0
        %425 = vmatmul.mubr.f32.gmra.mrb[0].mxu0 %v339
        %v426 = vpop.f32.mrb[0].mxu0
        %v427 = vadd.f32 %v326, %v426
        %v428 = vpop.f32.mrb[0].mxu0
        %429 = vdwg.mxu0
        %v430 = vmax.f32 %v412, 0.0
        %v431 = vmax.f32 %v417, 0.0
        %v432 = vmax.f32 %v422, 0.0
        %v433 = vmax.f32 %v427, 0.0
        %v434 = vld [vmem:[%s3] sm:$0xff]
        %v435 = vld [vmem:[%s3 + $0x8] sm:$0xff]
        %v436 = vld [vmem:[%s3 + $0x10] sm:$0xff]
        %v437 = vld [vmem:[%s3 + $0x18] sm:$0xff]
        %v438 = vld [vmem:[%s4] sm:$0xff]
        %v439 = vld [vmem:[%s4 + $0x8] sm:$0xff]
        %v440 = vld [vmem:[%s4 + $0x10] sm:$0xff]
        %v441 = vld [vmem:[%s4 + $0x18] sm:$0xff]
        %443 = vset.pattern.permute.xlu0 0
        %444 = vperm.xlu0 %443, %v438
        %v445 = vpop.permute.xlu0 %444
        %448 = vset.pattern.permute.xlu0 0
        %449 = vperm.xlu0 %448, %v439
        %v450 = vpop.permute.xlu0 %449
        %453 = vset.pattern.permute.xlu0 0
        %454 = vperm.xlu0 %453, %v440
        %v455 = vpop.permute.xlu0 %454
        %458 = vset.pattern.permute.xlu0 0
        %459 = vperm.xlu0 %458, %v441
        %v460 = vpop.permute.xlu0 %459
        %vm462 = vcmask 261120
        %v464 = vsel %vm462, %v434, 0
        %v467 = vsel %vm462, %v435, 0
        %v470 = vsel %vm462, %v436, 0
        %v473 = vsel %vm462, %v437, 0
        %475 = vmatprep.subr.mxu0 0.0
        %476 = vmatpush1.msra.mxu0 %v430
        %477 = vmatprep.subr.mxu0 0.0
        %478 = vmatpush1.msra.mxu0 %v431
        %479 = vmatprep.subr.mxu0 0.0
        %480 = vmatpush1.msra.mxu0 %v432
        %481 = vmatprep.subr.mxu0 0.0
        %482 = vmatpush1.msra.mxu0 %v433
        %483 = vmatprep.subr.mxu0 0.0
        %484 = vmatpush1.msra.mxu0 0.0
        %485 = vmatprep.subr.mxu0 0.0
        %486 = vmatpush1.msra.mxu0 0.0
        %487 = vmatprep.subr.mxu0 0.0
        %488 = vmatpush1.msra.mxu0 0.0
        %489 = vmatprep.subr.mxu0 0.0
        %490 = vmatpush1.msra.mxu0 0.0
        %491 = vmatprep.subr.mxu0 0.0
        %492 = vmatpush1.msra.mxu0 0.0
        %493 = vmatprep.subr.mxu0 0.0
        %494 = vmatpush1.msra.mxu0 0.0
        %495 = vmatprep.subr.mxu0 0.0
        %496 = vmatpush1.msra.mxu0 0.0
        %497 = vmatprep.subr.mxu0 0.0
        %498 = vmatpush1.msra.mxu0 0.0
        %499 = vmatprep.subr.mxu0 0.0
        %500 = vmatpush1.msra.mxu0 0.0
        %501 = vmatprep.subr.mxu0 0.0
        %502 = vmatpush1.msra.mxu0 0.0
        %503 = vmatprep.subr.mxu0 0.0
        %504 = vmatpush1.msra.mxu0 0.0
        %505 = vmatprep.subr.mxu0 0.0
        %506 = vmatpush1.msra.mxu0 0.0
        %507 = vmatprep.subr.mxu0 0.0
        %508 = vmatpush1.msra.mxu0 0.0
        %509 = vmatprep.subr.mxu0 0.0
        %510 = vmatpush1.msra.mxu0 0.0
        %511 = vmatprep.subr.mxu0 0.0
        %512 = vmatpush1.msra.mxu0 0.0
        %513 = vmatprep.subr.mxu0 0.0
        %514 = vmatpush1.msra.mxu0 0.0
        %515 = vmatprep.subr.mxu0 0.0
        %516 = vmatpush1.msra.mxu0 0.0
        %517 = vmatprep.subr.mxu0 0.0
        %518 = vmatpush1.msra.mxu0 0.0
        %519 = vmatprep.subr.mxu0 0.0
        %520 = vmatpush1.msra.mxu0 0.0
        %521 = vmatprep.subr.mxu0 0.0
        %522 = vmatpush1.msra.mxu0 0.0
        %523 = vmatprep.subr.mxu0 0.0
        %524 = vmatpush1.msra.mxu0 0.0
        %525 = vmatprep.subr.mxu0 0.0
        %526 = vmatpush1.msra.mxu0 0.0
        %527 = vmatprep.subr.mxu0 0.0
        %528 = vmatpush1.msra.mxu0 0.0
        %529 = vmatprep.subr.mxu0 0.0
        %530 = vmatpush1.msra.mxu0 0.0
        %531 = vmatprep.subr.mxu0 0.0
        %532 = vmatpush1.msra.mxu0 0.0
        %533 = vmatprep.subr.mxu0 0.0
        %534 = vmatpush1.msra.mxu0 0.0
        %535 = vmatprep.subr.mxu0 0.0
        %536 = vmatpush1.msra.mxu0 0.0
        %537 = vmatprep.subr.mxu0 0.0
        %538 = vmatpush1.msra.mxu0 0.0
        %539 = vmatprep.mubr.f32.mxu0 0.0
        %540 = vmatmul.mubr.f32.gmra.mrb[0].mxu0 %v464
        %v541 = vpop.f32.mrb[0].mxu0
        %v542 = vadd.f32 %v445, %v541
        %v543 = vpop.f32.mrb[0].mxu0
        %544 = vmatprep.mubr.f32.mxu0 0.0
        %545 = vmatmul.mubr.f32.gmra.mrb[0].mxu0 %v467
        %v546 = vpop.f32.mrb[0].mxu0
        %v547 = vadd.f32 %v450, %v546
        %v548 = vpop.f32.mrb[0].mxu0
        %549 = vmatprep.mubr.f32.mxu0 0.0
        %550 = vmatmul.mubr.f32.gmra.mrb[0].mxu0 %v470
        %v551 = vpop.f32.mrb[0].mxu0
        %v552 = vadd.f32 %v455, %v551
        %v553 = vpop.f32.mrb[0].mxu0
        %554 = vmatprep.mubr.f32.mxu0 0.0
        %555 = vmatmul.mubr.f32.gmra.mrb[0].mxu0 %v473
        %v556 = vpop.f32.mrb[0].mxu0
        %v557 = vadd.f32 %v460, %v556
        %v558 = vpop.f32.mrb[0].mxu0
        %559 = vdwg.mxu0
        %v560 = vmax.f32 %v542, 0.0
        %v561 = vmax.f32 %v547, 0.0
        %v562 = vmax.f32 %v552, 0.0
        %v563 = vmax.f32 %v557, 0.0
        %v564 = vld [vmem:[%s5] sm:$0xff]
        %v565 = vld [vmem:[%s6] sm:$0xff]
        %567 = vset.pattern.permute.xlu0 0
        %568 = vperm.xlu0 %567, %v565
        %v569 = vpop.permute.xlu0 %568
        %v572 = vsel %vm462, %v564, 0
        %574 = vmatprep.subr.mxu0 0.0
        %575 = vmatpush1.msra.mxu0 %v560
        %576 = vmatprep.subr.mxu0 0.0
        %577 = vmatpush1.msra.mxu0 %v561
        %578 = vmatprep.subr.mxu0 0.0
        %579 = vmatpush1.msra.mxu0 %v562
        %580 = vmatprep.subr.mxu0 0.0
        %581 = vmatpush1.msra.mxu0 %v563
        %582 = vmatprep.subr.mxu0 0.0
        %583 = vmatpush1.msra.mxu0 0.0
        %584 = vmatprep.subr.mxu0 0.0
        %585 = vmatpush1.msra.mxu0 0.0
        %586 = vmatprep.subr.mxu0 0.0
        %587 = vmatpush1.msra.mxu0 0.0
        %588 = vmatprep.subr.mxu0 0.0
        %589 = vmatpush1.msra.mxu0 0.0
        %590 = vmatprep.subr.mxu0 0.0
        %591 = vmatpush1.msra.mxu0 0.0
        %592 = vmatprep.subr.mxu0 0.0
        %593 = vmatpush1.msra.mxu0 0.0
        %594 = vmatprep.subr.mxu0 0.0
        %595 = vmatpush1.msra.mxu0 0.0
        %596 = vmatprep.subr.mxu0 0.0
        %597 = vmatpush1.msra.mxu0 0.0
        %598 = vmatprep.subr.mxu0 0.0
        %599 = vmatpush1.msra.mxu0 0.0
        %600 = vmatprep.subr.mxu0 0.0
        %601 = vmatpush1.msra.mxu0 0.0
        %602 = vmatprep.subr.mxu0 0.0
        %603 = vmatpush1.msra.mxu0 0.0
        %604 = vmatprep.subr.mxu0 0.0
        %605 = vmatpush1.msra.mxu0 0.0
        %606 = vmatprep.subr.mxu0 0.0
        %607 = vmatpush1.msra.mxu0 0.0
        %608 = vmatprep.subr.mxu0 0.0
        %609 = vmatpush1.msra.mxu0 0.0
        %610 = vmatprep.subr.mxu0 0.0
        %611 = vmatpush1.msra.mxu0 0.0
        %612 = vmatprep.subr.mxu0 0.0
        %613 = vmatpush1.msra.mxu0 0.0
        %614 = vmatprep.subr.mxu0 0.0
        %615 = vmatpush1.msra.mxu0 0.0
        %616 = vmatprep.subr.mxu0 0.0
        %617 = vmatpush1.msra.mxu0 0.0
        %618 = vmatprep.subr.mxu0 0.0
        %619 = vmatpush1.msra.mxu0 0.0
        %620 = vmatprep.subr.mxu0 0.0
        %621 = vmatpush1.msra.mxu0 0.0
        %622 = vmatprep.subr.mxu0 0.0
        %623 = vmatpush1.msra.mxu0 0.0
        %624 = vmatprep.subr.mxu0 0.0
        %625 = vmatpush1.msra.mxu0 0.0
        %626 = vmatprep.subr.mxu0 0.0
        %627 = vmatpush1.msra.mxu0 0.0
        %628 = vmatprep.subr.mxu0 0.0
        %629 = vmatpush1.msra.mxu0 0.0
        %630 = vmatprep.subr.mxu0 0.0
        %631 = vmatpush1.msra.mxu0 0.0
        %632 = vmatprep.subr.mxu0 0.0
        %633 = vmatpush1.msra.mxu0 0.0
        %634 = vmatprep.subr.mxu0 0.0
        %635 = vmatpush1.msra.mxu0 0.0
        %636 = vmatprep.subr.mxu0 0.0
        %637 = vmatpush1.msra.mxu0 0.0
        %638 = vmatprep.mubr.f32.mxu0 0.0
        %639 = vmatmul.mubr.f32.gmra.mrb[0].mxu0 %v572
        %v640 = vpop.f32.mrb[0].mxu0
        %v641 = vadd.f32 %v569, %v640
        %v642 = vpop.f32.mrb[0].mxu0
        %643 = vdwg.mxu0
        %vm644 = vcmask 130048
        %645 = vst.msk [vmem:[%s291] sm:$0xff] %vm644, %v641
        %s646 = sand.u32 %s197, 1
        %s647 = scalar_lea.sflag [#allocation3], %s646
        %s648 = sand.u32 %s197, 1
        %s649 = smul.addr %s648, 8
        %s650 = scalar_lea.vmem [#allocation2], %s649
        // Predicated region
        $region49: #{net_3xconv1d_forward.1} parent=47 // pred_check
          %p651 = pneg %p207
        $region50: #{net_3xconv1d_forward.1} parent=47 // pred_check_branch
          %653 = sbr.rel (%p651) target = $region52
        $region51: #{net_3xconv1d_forward.1} parent=47 // pred_region
          %s655 = ssub.s32 128, 128
          %656 = vsyncadd %s647, %s655
          %s657 = sadd.s32 %s26, %s25
          %s658 = smul.addr %s657, 128
          %s659 = scalar_lea.hbm %s7, %s658
          %s661 = sshll.u32 %s650, 4
          %s662 = int_to_ptr.vmem [resolvable:$true] %s661
          %664 = dma.vmem_to_hbm [thread:$0]  %s662, 128, %s659, %s647
        $region52: #{net_3xconv1d_forward.1} parent=47 // pred_fallthru
          _
      $region48: #{net_3xconv1d_forward.1} parent=5 // pred_fallthru
        _
      %p665 = scmp.le.s32.totalorder 2, %s16
      // Predicated region
      $region53: #{net_3xconv1d_forward.1} parent=5 // pred_check
        %p666 = pneg %p665
      $region54: #{net_3xconv1d_forward.1} parent=5 // pred_check_branch
        %668 = sbr.rel (%p666) target = $region56
      $region55: #{net_3xconv1d_forward.1} parent=5 // pred_region
        %s669 = ssub.s32 %s16, 2
        // Predicated region
        $region57: #{net_3xconv1d_forward.1} parent=55 // pred_check
          %p670 = pneg %p213
        $region58: #{net_3xconv1d_forward.1} parent=55 // pred_check_branch
          %672 = sbr.rel (%p670) target = $region60
        $region59: #{net_3xconv1d_forward.1} parent=55 // pred_region
          %s673 = sand.u32 %s198, 1
          %s674 = scalar_lea.sflag [#allocation3], %s673
          %s675 = sand.u32 %s198, 1
          %s676 = smul.addr %s675, 8
          %s677 = scalar_lea.vmem [#allocation2], %s676
          %678 = dma.done %s674, 128
        $region60: #{net_3xconv1d_forward.1} parent=55 // pred_fallthru
          _
      $region56: #{net_3xconv1d_forward.1} parent=5 // pred_fallthru
        _
    $region6: #{net_3xconv1d_forward.1} parent=1 // loop_footer
      %s20 = sadd.s32 1, %s16
    $region7: #{net_3xconv1d_forward.1} parent=1 // loop_footer_branch
      %15 = sbr.rel target = $region3
    $region8: #{net_3xconv1d_forward.1} parent=1 // loop_exit
      _
    %679 = vsyncpa [#allocation3], 1
    %s680 = scalar_lea.sflag [#allocation3], 1
    %681 = vsyncpa %s680, 1

</llo_original>
